<compile_context>
chip_gen: v7x
topology: tpu7x:2x2x1
jax: 0.10.0
libtpu: 0.0.40
codegen_flags: <defaults>
</compile_context>

<pallas_src>
import functools

import jax
import jax.numpy as jnp
from jax.experimental import pallas as pl
from jax.experimental.pallas import tpu as pltpu

_LANE = 128


# --------------------------------------------------------------------------
# Fused single-pass kernel (whole tensor resident in VMEM).
# --------------------------------------------------------------------------
def _fused_quantize_kernel(x_ref, o_ref, *, n_levels):
    x = x_ref[...].astype(jnp.float32)
    x_min = jnp.min(x, keepdims=True)          # (1, 1)
    x_max = jnp.max(x, keepdims=True)          # (1, 1)

    scale = (x_max - x_min) / jnp.float32(n_levels - 1)
    safe_scale = jnp.where(scale <= 0.0, jnp.float32(1.0), scale)
    inv_scale = jnp.float32(1.0) / safe_scale  # one (1,1) divide total

    q = jnp.clip(
        jnp.round((x - x_min) * inv_scale),
        0.0,
        jnp.float32(n_levels - 1),
    )
    o_ref[...] = (q * safe_scale + x_min).astype(o_ref.dtype)


# --------------------------------------------------------------------------
# Two-pass tiled kernels (large tensors).
# --------------------------------------------------------------------------
def _minmax_kernel(x_ref, min_ref, max_ref, *, rows, block_rows):
    """Pass 1: tiled per-tensor min/max reduction."""
    i = pl.program_id(0)

    @pl.when(i == 0)
    def _():
        min_ref[...] = jnp.full((1, 1), jnp.inf, dtype=jnp.float32)
        max_ref[...] = jnp.full((1, 1), -jnp.inf, dtype=jnp.float32)

    x = x_ref[...].astype(jnp.float32)

    if rows % block_rows != 0:
        # Ragged last block: mask out rows beyond the real array extent
        # (their VMEM contents are undefined).
        row_ids = i * block_rows + jax.lax.broadcasted_iota(
            jnp.int32, x.shape, 0)
        valid = row_ids < rows
        x_for_min = jnp.where(valid, x, jnp.inf)
        x_for_max = jnp.where(valid, x, -jnp.inf)
    else:
        x_for_min = x
        x_for_max = x

    min_ref[...] = jnp.minimum(min_ref[...], jnp.min(x_for_min, keepdims=True))
    max_ref[...] = jnp.maximum(max_ref[...], jnp.max(x_for_max, keepdims=True))


def _quantize_kernel(x_ref, min_ref, max_ref, o_ref, *, n_levels):
    """Pass 2: tiled elementwise uniform fake-quantization."""
    x = x_ref[...].astype(jnp.float32)
    x_min = min_ref[...]  # (1, 1) -> broadcasts
    x_max = max_ref[...]  # (1, 1)

    scale = (x_max - x_min) / jnp.float32(n_levels - 1)
    # Guard against a constant tensor (scale == 0).
    safe_scale = jnp.where(scale <= 0.0, jnp.float32(1.0), scale)
    # One (1,1) divide per block; per-element work is multiply only.
    inv_scale = jnp.float32(1.0) / safe_scale

    q = jnp.clip(
        jnp.round((x - x_min) * inv_scale),
        0.0,
        jnp.float32(n_levels - 1),
    )
    o_ref[...] = (q * safe_scale + x_min).astype(o_ref.dtype)


# --------------------------------------------------------------------------
# Wrapper
# --------------------------------------------------------------------------
def base_quantizer_forward(x, bits=4, block_rows=1024,
                           single_pass_max_rows=2048):
    """Uniform fake-quantization forward of BaseQuantizer(bits).

    x: NCHW float array. Returns same shape/dtype.
    """
    n_levels = 2 ** bits
    orig_shape = x.shape
    orig_dtype = x.dtype
    total = x.size

    x_flat = x.reshape(-1)
    pad = (-total) % _LANE
    if pad:
        # TODO(synk): non-128-divisible element counts take one extra HBM copy
        # here; the pad value (first element) keeps the min/max exact.  Typical
        # NCHW activations hit the zero-copy path.
        x_flat = jnp.concatenate(
            [x_flat, jnp.full((pad,), x_flat[0], x_flat.dtype)])
    rows = x_flat.size // _LANE
    x2d = x_flat.reshape(rows, _LANE)
    nbytes = int(x2d.nbytes)

    if rows <= single_pass_max_rows:
        # ---- Fused single-pass path (whole tensor in VMEM) ---------------
        out2d = pl.pallas_call(
            functools.partial(_fused_quantize_kernel, n_levels=n_levels),
            out_shape=jax.ShapeDtypeStruct((rows, _LANE), orig_dtype),
            cost_estimate=pl.CostEstimate(
                flops=8 * rows * _LANE,
                transcendentals=0,
                bytes_accessed=2 * nbytes),
        )(x2d)
    else:
        # ---- Tiled two-pass path ------------------------------------------
        brows = min(block_rows, rows)      # brows == rows, or a multiple of 8
        grid = (pl.cdiv(rows, brows),)

        # Pass 1: min/max reduction.
        x_min, x_max = pl.pallas_call(
            functools.partial(_minmax_kernel, rows=rows, block_rows=brows),
            out_shape=(jax.ShapeDtypeStruct((1, 1), jnp.float32),
                       jax.ShapeDtypeStruct((1, 1), jnp.float32)),
            grid_spec=pltpu.PrefetchScalarGridSpec(
                num_scalar_prefetch=0,
                grid=grid,
                in_specs=[pl.BlockSpec((brows, _LANE), lambda i: (i, 0))],
                out_specs=(pl.BlockSpec((1, 1), lambda i: (0, 0)),
                           pl.BlockSpec((1, 1), lambda i: (0, 0))),
            ),
            compiler_params=pltpu.CompilerParams(
                dimension_semantics=("arbitrary",)),
            cost_estimate=pl.CostEstimate(
                flops=2 * rows * _LANE,
                transcendentals=0,
                bytes_accessed=nbytes + 8),
        )(x2d)

        # Pass 2: elementwise quantize/dequantize.
        out2d = pl.pallas_call(
            functools.partial(_quantize_kernel, n_levels=n_levels),
            out_shape=jax.ShapeDtypeStruct((rows, _LANE), orig_dtype),
            grid_spec=pltpu.PrefetchScalarGridSpec(
                num_scalar_prefetch=0,
                grid=grid,
                in_specs=[pl.BlockSpec((brows, _LANE), lambda i: (i, 0)),
                          pl.BlockSpec((1, 1), lambda i: (0, 0)),
                          pl.BlockSpec((1, 1), lambda i: (0, 0))],
                out_specs=pl.BlockSpec((brows, _LANE), lambda i: (i, 0)),
            ),
            compiler_params=pltpu.CompilerParams(
                dimension_semantics=("parallel",)),
            cost_estimate=pl.CostEstimate(
                flops=6 * rows * _LANE,
                transcendentals=0,
                bytes_accessed=2 * nbytes + 8),
        )(x2d, x_min, x_max)

    out_flat = out2d.reshape(-1)
    if pad:
        out_flat = out_flat[:total]
    return out_flat.reshape(orig_shape)


def _reference(x, bits=4):
    n_levels = 2 ** bits
    xf = x.astype(jnp.float32)
    x_min = jnp.min(xf)
    x_max = jnp.max(xf)
    scale = (x_max - x_min) / (n_levels - 1)
    scale = jnp.where(scale <= 0.0, 1.0, scale)
    inv_scale = 1.0 / scale
    q = jnp.clip(jnp.round((xf - x_min) * inv_scale), 0, n_levels - 1)
    return (q * scale + x_min).astype(x.dtype)


if __name__ == "__main__":
    key = jax.random.PRNGKey(0)
    k1, k2, k3 = jax.random.split(key, 3)

    # 1) Canonical small NCHW activation tensor -> fused single-pass path.
    x1 = jax.random.normal(k1, (2, 4, 16, 16), dtype=jnp.float32)
    out1 = jax.block_until_ready(base_quantizer_forward(x1, bits=4))
    ref1 = _reference(x1, bits=4)
    assert out1.shape == x1.shape and out1.dtype == x1.dtype
    assert jnp.allclose(out1, ref1, atol=1e-5, rtol=1e-5)

    # 2) Force the tiled two-pass pipeline + ragged-last-block masking path
    #    (rows=24, block_rows=16 -> grid=(2,), last block partially valid).
    x2 = jax.random.normal(k2, (3, 4, 16, 16), dtype=jnp.float32)
    out2 = jax.block_until_ready(
        base_quantizer_forward(x2, bits=4, block_rows=16,
                               single_pass_max_rows=0))
    ref2 = _reference(x2, bits=4)
    assert out2.shape == x2.shape and out2.dtype == x2.dtype
    assert jnp.allclose(out2, ref2, atol=1e-5, rtol=1e-5)

    # 3) Non-128-divisible element count -> lane-pad path (fused).
    x3 = jax.random.normal(k3, (2, 3, 17, 19), dtype=jnp.float32)
    out3 = jax.block_until_ready(base_quantizer_forward(x3, bits=4))
    ref3 = _reference(x3, bits=4)
    assert out3.shape == x3.shape and out3.dtype == x3.dtype
    assert jnp.allclose(out3, ref3, atol=1e-5, rtol=1e-5)

    print("KERNEL_OK")
</pallas_src>

<mosaic_0001>
module attributes {stable_mosaic.version = 11 : i64} {
  func.func @_fused_quantize_kernel(%arg0: memref<16x128xf32, #tpu.memory_space<vmem>>, %arg1: memref<16x128xf32, #tpu.memory_space<vmem>>) attributes {dimension_semantics = [], scalar_prefetch = 0 : i64, scratch_operands = 0 : i64, tpu.core_type = #tpu.core_type<tc>} {
    %c0 = arith.constant 0 : index
    %c0_0 = arith.constant 0 : index
    %0 = vector.load %arg0[%c0, %c0_0] : memref<16x128xf32, #tpu.memory_space<vmem>>, vector<16x128xf32>
    %1 = vector.shape_cast %0 : vector<16x128xf32> to vector<1x16x128xf32>
    %cst = arith.constant dense<0x7F800000> : vector<1xf32>
    %2 = vector.multi_reduction <minimumf>, %1, %cst [1, 2] : vector<1x16x128xf32> to vector<1xf32>
    %3 = vector.shape_cast %2 : vector<1xf32> to vector<1x1x1xf32>
    %4 = vector.extract %3[0, 0, 0] : f32 from vector<1x1x1xf32>
    %5 = vector.broadcast %4 : f32 to vector<1x1xf32>
    %6 = vector.shape_cast %0 : vector<16x128xf32> to vector<1x16x128xf32>
    %cst_1 = arith.constant dense<0xFF800000> : vector<1xf32>
    %7 = vector.multi_reduction <maximumf>, %6, %cst_1 [1, 2] : vector<1x16x128xf32> to vector<1xf32>
    %8 = vector.shape_cast %7 : vector<1xf32> to vector<1x1x1xf32>
    %9 = vector.extract %8[0, 0, 0] : f32 from vector<1x1x1xf32>
    %10 = vector.broadcast %9 : f32 to vector<1x1xf32>
    %11 = arith.subf %10, %5 : vector<1x1xf32>
    %cst_2 = arith.constant 1.500000e+01 : f32
    %12 = vector.broadcast %cst_2 : f32 to vector<1x1xf32>
    %13 = arith.divf %11, %12 : vector<1x1xf32>
    %cst_3 = arith.constant 0.000000e+00 : f32
    %14 = vector.broadcast %cst_3 : f32 to vector<1x1xf32>
    %15 = arith.cmpf ole, %13, %14 : vector<1x1xf32>
    %cst_4 = arith.constant 1.000000e+00 : f32
    %16 = vector.broadcast %cst_4 : f32 to vector<1x1xf32>
    %17 = arith.select %15, %16, %13 : vector<1x1xi1>, vector<1x1xf32>
    %cst_5 = arith.constant 1.000000e+00 : f32
    %18 = vector.broadcast %cst_5 : f32 to vector<1x1xf32>
    %19 = arith.divf %18, %17 : vector<1x1xf32>
    %20 = vector.broadcast %5 : vector<1x1xf32> to vector<16x128xf32>
    %21 = arith.subf %0, %20 : vector<16x128xf32>
    %22 = vector.broadcast %19 : vector<1x1xf32> to vector<16x128xf32>
    %23 = arith.mulf %21, %22 : vector<16x128xf32>
    %24 = math.roundeven %23 : vector<16x128xf32>
    %cst_6 = arith.constant 0.000000e+00 : f32
    %cst_7 = arith.constant 1.500000e+01 : f32
    %25 = vector.broadcast %cst_6 : f32 to vector<16x128xf32>
    %26 = arith.maximumf %25, %24 : vector<16x128xf32>
    %27 = vector.broadcast %cst_7 : f32 to vector<16x128xf32>
    %28 = arith.minimumf %27, %26 : vector<16x128xf32>
    %29 = vector.broadcast %17 : vector<1x1xf32> to vector<16x128xf32>
    %30 = arith.mulf %28, %29 : vector<16x128xf32>
    %31 = vector.broadcast %5 : vector<1x1xf32> to vector<16x128xf32>
    %32 = arith.addf %30, %31 : vector<16x128xf32>
    %c0_8 = arith.constant 0 : index
    %c0_9 = arith.constant 0 : index
    %33 = vector.load %arg1[%c0_8, %c0_9] : memref<16x128xf32, #tpu.memory_space<vmem>>, vector<16x128xf32>
    tpu.vector_store %arg1[%c0_8, %c0_9], %32 {strides = array<i32>} : memref<16x128xf32, #tpu.memory_space<vmem>>, vector<16x128xf32>,
    return
  }
}

</mosaic_0001>

<llo_original>
// kernel: tpu_custom_call.1
$region0: #{tpu_custom_call.1}
  #allocation0 [shape = 'u32[]', space=smem, size = 0x4, offset = 0x4, fixed_abs, tag = 'smem constant byte address 0x4 - core index']
  #allocation1 [shape = 'u32[144,128]{1,0:T(1,128)}', space=vmem, size = 0x12000, scoped, tag = 'internal scratch']
  %s0 = inlined_call_operand.hbm [shape: f32[16,128], index: 0, kind: input, shape index: {}]
  %s1 = inlined_call_operand.hbm [shape: f32[16,128], index: 1, kind: output, shape index: {}]
  %s2 = sld [smem:[#allocation0]]
  $region18: #{tpu_custom_call.1} parent=0
    _
  %s4 = ssub.s32 1, %s2
  %s5 = scalar_select 0, %s4, %s2
  $region1: #{tpu_custom_call.1} parent=0
    #allocation2 [shape = 'u8[8192]{0}', space=vmem, size = 0x2000, scoped, tag = 'input window, operand 0, single buffered']
    #allocation3 [shape = 's32[1]{0}', space=sflag, size = 0x4, scoped, tag = 'scoped memory for tpu_custom_call.1']
    #allocation4 [shape = 's32[1]{0}', space=sflag, size = 0x4, scoped, tag = 'scoped memory for tpu_custom_call.1']
    #allocation5 [shape = 'u8[8192]{0}', space=vmem, size = 0x2000, scoped, tag = 'output window, operand 0, single buffered']
    %6 = vsyncpa [#allocation3], 0
    %7 = vsyncpa [#allocation4], 0
    // Predicated region
    $region2: #{tpu_custom_call.1} parent=1 // pred_check
      _
    $region3: #{tpu_custom_call.1} parent=1 // pred_check_branch
      %9 = sbr.rel (0) target = $region5
    $region4: #{tpu_custom_call.1} parent=1 // pred_region
      %s11 = ssub.s32 256, 256
      %12 = vsyncadd [#allocation3], %s11
      %s13 = sshll.u32 [#allocation2], 4
      %s14 = int_to_ptr.vmem [resolvable:$true] %s13
      %19 = dma.hbm_to_vmem [thread:$0]  %s0, 256, %s14, [#allocation3], 128, 128, 8
    $region5: #{tpu_custom_call.1} parent=1 // pred_fallthru
      _
    // Predicated region
    $region6: #{tpu_custom_call.1} parent=1 // pred_check
      _
    $region7: #{tpu_custom_call.1} parent=1 // pred_check_branch
      %21 = sbr.rel (0) target = $region9
    $region8: #{tpu_custom_call.1} parent=1 // pred_region
      %22 = dma.done [#allocation3], 256
    $region9: #{tpu_custom_call.1} parent=1 // pred_fallthru
      _
    %v23 = vld [vmem:[#allocation2] sm:$0xff]
    %v24 = vld [vmem:[#allocation2 + $0x8] sm:$0xff]
    %v25 = vmin.f32 %v23, %v24
    %26 = vmin.xlane.f32.xlu0 %v25
    %v27 = vpop.xlane.xlu0 %26
    %v28 = vrot.slane %v27, 4
    %v29 = vmin.f32 %v27, %v28
    %v30 = vrot.slane %v29, 2
    %v31 = vmin.f32 %v29, %v30
    %v32 = vrot.slane %v31, 1
    %v33 = vmin.f32 %v31, %v32
    %s34 = vtos %v33
    %v35 = vstv %s34
    %v36 = vmax.f32 %v23, %v24
    %37 = vmax.xlane.f32.xlu0 %v36
    %v38 = vpop.xlane.xlu0 %37
    %v39 = vrot.slane %v38, 4
    %v40 = vmax.f32 %v38, %v39
    %v41 = vrot.slane %v40, 2
    %v42 = vmax.f32 %v40, %v41
    %v43 = vrot.slane %v42, 1
    %v44 = vmax.f32 %v42, %v43
    %s45 = vtos %v44
    %v46 = vstv %s45
    %v47 = vsub.f32 %v46, %v35
    %v48 = vrcp.pop 15.0
    %v49 = vmul.f32 %v47, %v48
    %vm50 = vcmp.le.f32.partialorder %v49, 0.0
    %v51 = vsel %vm50, 1.0, %v49
    %v52 = vrcp.pop %v51
    %v53 = vmul.f32 1.0, %v52
    %v54 = vsub.f32 %v23, %v35
    %v55 = vsub.f32 %v24, %v35
    %v56 = vmul.f32 %v54, %v53
    %v57 = vmul.f32 %v55, %v53
    %v58 = vround.ne.pseudo %v56
    %v59 = vround.ne.pseudo %v57
    %v60 = vmax.f32 %v58, 0.0
    %v61 = vmax.f32 %v59, 0.0
    %v62 = vmin.f32 %v60, 15.0
    %v63 = vmin.f32 %v61, 15.0
    %v64 = vmul.f32 %v62, %v51
    %v65 = vmul.f32 %v63, %v51
    %v66 = vadd.f32 %v64, %v35
    %v67 = vadd.f32 %v65, %v35
    %68 = vst [vmem:[#allocation5] sm:$0xff] %v66
    %69 = vst [vmem:[#allocation5 + $0x8] sm:$0xff] %v67
    // Predicated region
    $region10: #{tpu_custom_call.1} parent=1 // pred_check
      _
    $region11: #{tpu_custom_call.1} parent=1 // pred_check_branch
      %71 = sbr.rel (0) target = $region13
    $region12: #{tpu_custom_call.1} parent=1 // pred_region
      %s73 = ssub.s32 256, 256
      %74 = vsyncadd [#allocation4], %s73
      %s75 = sshll.u32 [#allocation5], 4
      %s76 = int_to_ptr.vmem [resolvable:$true] %s75
      %81 = dma.vmem_to_hbm [thread:$0]  %s76, 256, %s1, [#allocation4], 128, 128, 8
    $region13: #{tpu_custom_call.1} parent=1 // pred_fallthru
      _
    // Predicated region
    $region14: #{tpu_custom_call.1} parent=1 // pred_check
      _
    $region15: #{tpu_custom_call.1} parent=1 // pred_check_branch
      %83 = sbr.rel (0) target = $region17
    $region16: #{tpu_custom_call.1} parent=1 // pred_region
      %84 = dma.done [#allocation4], 256
    $region17: #{tpu_custom_call.1} parent=1 // pred_fallthru
      _
    %85 = vsyncpa [#allocation3], 1
    %86 = vsyncpa [#allocation4], 1

</llo_original>
